<compile_context>
chip_gen: v7x
topology: tpu7x:2x2x1
jax: 0.10.0
libtpu: 0.0.40
codegen_flags: <defaults>
</compile_context>

<pallas_src>
import math

import jax
import jax.numpy as jnp
from jax.experimental import pallas as pl
from jax.experimental.pallas import tpu as pltpu

PENALTY_VALUE = -1.0
DECAY_RATE = 1.0 / 60.0
NEG_EMOTION_THRESHOLD = -0.2

_LANES = 128
_MAX_BLOCK_ROWS = 2048  # (2048, 128) f32 = 1 MiB per block


def _penalty_kernel(cp_ref, x_ref, o_ref):
    # cp_ref: SMEM scalar state, shape (1,) f32
    # x_ref : (block_rows, 128) tile in the caller's native dtype
    # o_ref : (block_rows, 128) f32 tile (matches PyTorch's f32 `where` output)
    cp = cp_ref[0]
    lo = jnp.maximum(cp, jnp.float32(PENALTY_VALUE))  # value where emotion < threshold
    hi = jnp.maximum(cp, jnp.float32(0.0))            # value elsewhere
    x = x_ref[...]
    below = x < jnp.asarray(NEG_EMOTION_THRESHOLD, x.dtype)
    o_ref[...] = jnp.where(below, lo, hi)


def _plain_jax_forward(emotion_value: jax.Array, cp_scalar: jax.Array) -> jax.Array:
    lo = jnp.maximum(cp_scalar, jnp.float32(PENALTY_VALUE))
    hi = jnp.maximum(cp_scalar, jnp.float32(0.0))
    below = emotion_value < jnp.asarray(NEG_EMOTION_THRESHOLD, emotion_value.dtype)
    return jnp.where(below, lo, hi)


def negative_emotion_penalty_forward(emotion_value: jax.Array,
                                     current_penalty: jax.Array) -> jax.Array:
    """Returns the penalty tensor (same shape as emotion_value, f32). This is
    also the value PyTorch writes back into the `current_penalty` buffer; the
    caller must carry it forward as the new state."""
    orig_shape = emotion_value.shape
    n = math.prod(orig_shape) if orig_shape else 1
    cp = jnp.reshape(current_penalty, (-1,))[:1].astype(jnp.float32)  # (1,) SMEM scalar

    # Tiny or lane-misaligned tensors: a single fused XLA elementwise op beats
    # the kernel launch plus any padding / relayout traffic outright.
    if n == 0 or n % _LANES != 0 or n < 8 * _LANES:
        return _plain_jax_forward(emotion_value, cp[0])

    rows = n // _LANES
    block_rows = min(_MAX_BLOCK_ROWS, rows)      # full-dim block when rows < 2048
    x2d = emotion_value.reshape(rows, _LANES)    # no pad, no cast: native dtype in
    grid = (pl.cdiv(rows, block_rows),)          # ragged last block handled by Pallas

    out2d = pl.pallas_call(
        _penalty_kernel,
        out_shape=jax.ShapeDtypeStruct((rows, _LANES), jnp.float32),
        grid=grid,
        in_specs=[
            pl.BlockSpec(memory_space=pltpu.SMEM),                   # current_penalty scalar
            pl.BlockSpec((block_rows, _LANES), lambda i: (i, 0)),    # emotion tile
        ],
        out_specs=pl.BlockSpec((block_rows, _LANES), lambda i: (i, 0)),
        compiler_params=pltpu.CompilerParams(
            dimension_semantics=("parallel",)),
        cost_estimate=pl.CostEstimate(
            flops=2 * n,
            transcendentals=0,
            bytes_accessed=n * emotion_value.dtype.itemsize + n * 4),
    )(cp, x2d)

    return out2d.reshape(orig_shape)


def decay_penalty(current_penalty: jax.Array, time_step: float = 1.0) -> jax.Array:
    # Pure-JAX glue: tiny scalar buffer op, no hot path worth a Pallas kernel.
    return current_penalty * jnp.exp(-DECAY_RATE * time_step)


if __name__ == "__main__":
    key = jax.random.PRNGKey(0)
    k1, k2 = jax.random.split(key)

    # --- Small demo shape matching the module's NCHW-style emotion map -------
    emotion_value = jax.random.uniform(
        k1, (2, 4, 16, 16), dtype=jnp.float32, minval=-1.0, maxval=1.0)
    current_penalty = jnp.zeros((1,), dtype=jnp.float32)   # registered buffer init

    out = jax.block_until_ready(
        negative_emotion_penalty_forward(emotion_value, current_penalty))

    ref = jnp.maximum(
        current_penalty[0],
        jnp.where(emotion_value < NEG_EMOTION_THRESHOLD,
                  jnp.float32(PENALTY_VALUE), jnp.float32(0.0)))
    assert out.shape == emotion_value.shape and out.dtype == jnp.float32
    assert jnp.array_equal(out, ref), "mismatch vs reference (small)"

    # --- Second check: multi-block grid with a ragged last block -------------
    # rows = 5120, block = 2048 rows -> grid of 3 with a partial final block.
    emotion_big = jax.random.uniform(
        k2, (2, 5, 256, 256), dtype=jnp.float32, minval=-1.0, maxval=1.0)
    cp_nonzero = jnp.asarray([-0.5], dtype=jnp.float32)

    out_big = jax.block_until_ready(
        negative_emotion_penalty_forward(emotion_big, cp_nonzero))
    ref_big = jnp.maximum(
        cp_nonzero[0],
        jnp.where(emotion_big < NEG_EMOTION_THRESHOLD,
                  jnp.float32(PENALTY_VALUE), jnp.float32(0.0)))
    assert jnp.array_equal(out_big, ref_big), "mismatch vs reference (ragged/multi-block)"

    # Buffer decay step (state carried by caller, as in the nn.Module).
    decayed = jax.block_until_ready(decay_penalty(cp_nonzero, time_step=1.0))
    assert decayed.shape == (1,)

    print("KERNEL_OK")
</pallas_src>

<mosaic_0001>
module attributes {stable_mosaic.version = 11 : i64} {
  func.func @_penalty_kernel(%arg0: i32, %arg1: memref<1xf32, #tpu.memory_space<smem>>, %arg2: memref<16x128xf32, #tpu.memory_space<vmem>>, %arg3: memref<16x128xf32, #tpu.memory_space<vmem>>) attributes {dimension_semantics = [#tpu.dimension_semantics<parallel>], iteration_bounds = array<i64: 1>, scalar_prefetch = 0 : i64, scratch_operands = 0 : i64, tpu.core_type = #tpu.core_type<tc>, window_params = [{transform_indices = @transform_0, window_bounds = array<i64: 1>}, {transform_indices = @transform_1, window_bounds = array<i64: 16, 128>}, {transform_indices = @transform_2, window_bounds = array<i64: 16, 128>}]} {
    %c0 = arith.constant 0 : index
    %0 = memref.load %arg1[%c0] : memref<1xf32, #tpu.memory_space<smem>>
    %cst = arith.constant -1.000000e+00 : f32
    %1 = arith.maximumf %0, %cst : f32
    %cst_0 = arith.constant 0.000000e+00 : f32
    %2 = arith.maximumf %0, %cst_0 : f32
    %c0_1 = arith.constant 0 : index
    %c0_2 = arith.constant 0 : index
    %3 = vector.load %arg2[%c0_1, %c0_2] : memref<16x128xf32, #tpu.memory_space<vmem>>, vector<16x128xf32>
    %cst_3 = arith.constant -2.000000e-01 : f32
    %4 = vector.broadcast %cst_3 : f32 to vector<16x128xf32>
    %5 = arith.cmpf olt, %3, %4 : vector<16x128xf32>
    %6 = vector.broadcast %1 : f32 to vector<16x128xf32>
    %7 = vector.broadcast %2 : f32 to vector<16x128xf32>
    %8 = arith.select %5, %6, %7 : vector<16x128xi1>, vector<16x128xf32>
    %c0_4 = arith.constant 0 : index
    %c0_5 = arith.constant 0 : index
    %9 = vector.load %arg3[%c0_4, %c0_5] : memref<16x128xf32, #tpu.memory_space<vmem>>, vector<16x128xf32>
    tpu.vector_store %arg3[%c0_4, %c0_5], %8 {strides = array<i32>} : memref<16x128xf32, #tpu.memory_space<vmem>>, vector<16x128xf32>,
    return
  }
  func.func @transform_0(%arg0: i32) -> i32 {
    %c0_i32 = arith.constant 0 : i32
    %c0_i32_0 = arith.constant 0 : i32
    return %c0_i32 : i32
  }
  func.func @transform_1(%arg0: i32) -> (i32, i32) {
    %c0_i32 = arith.constant 0 : i32
    %c0_i32_0 = arith.constant 0 : i32
    return %arg0, %c0_i32 : i32, i32
  }
  func.func @transform_2(%arg0: i32) -> (i32, i32) {
    %c0_i32 = arith.constant 0 : i32
    %c0_i32_0 = arith.constant 0 : i32
    return %arg0, %c0_i32 : i32, i32
  }
}

</mosaic_0001>

<llo_original>
// kernel: tpu_custom_call.1
$region0: #{tpu_custom_call.1}
  #allocation0 [shape = 'u32[]', space=smem, size = 0x4, offset = 0x4, fixed_abs, tag = 'smem constant byte address 0x4 - core index']
  #allocation1 [shape = 'u32[144,128]{1,0:T(1,128)}', space=vmem, size = 0x12000, scoped, tag = 'internal scratch']
  #allocation2 [shape = 'f32[1]{0:T(128)S(6)}', space=smem, size = 0x200, scoped, tag = 'scoped memory for tpu_custom_call.1']
  %s0 = inlined_call_operand.<no memory space> [shape: f32[1], index: 0, kind: input, shape index: {}]
  %s1 = inlined_call_operand.hbm [shape: f32[16,128], index: 1, kind: input, shape index: {}]
  %s2 = inlined_call_operand.hbm [shape: f32[16,128], index: 2, kind: output, shape index: {}]
  %s3 = sld [smem:[#allocation0]]
  $region22: #{tpu_custom_call.1} parent=0
    _
  %s5 = ssub.s32 1, %s3
  %s6 = scalar_select 0, %s5, %s3
  %7 = sst [smem:[#allocation2]] %s0
  $region1: #{tpu_custom_call.1} parent=0
    #allocation3 [shape = 'u8[8192]{0}', space=vmem, size = 0x2000, scoped, tag = 'input window, operand 1, single buffered']
    #allocation4 [shape = 's32[1]{0}', space=sflag, size = 0x4, scoped, tag = 'scoped memory for tpu_custom_call.1']
    #allocation5 [shape = 's32[1]{0}', space=sflag, size = 0x4, scoped, tag = 'scoped memory for tpu_custom_call.1']
    #allocation6 [shape = 'u8[8192]{0}', space=vmem, size = 0x2000, scoped, tag = 'output window, operand 0, single buffered']
    %8 = vsyncpa [#allocation4], 0
    %9 = vsyncpa [#allocation5], 0
    // Predicated region
    $region2: #{tpu_custom_call.1} parent=1 // pred_check
      _
    $region3: #{tpu_custom_call.1} parent=1 // pred_check_branch
      %11 = sbr.rel (0) target = $region5
    $region4: #{tpu_custom_call.1} parent=1 // pred_region
      _
    $region5: #{tpu_custom_call.1} parent=1 // pred_fallthru
      _
    // Predicated region
    $region6: #{tpu_custom_call.1} parent=1 // pred_check
      _
    $region7: #{tpu_custom_call.1} parent=1 // pred_check_branch
      %13 = sbr.rel (0) target = $region9
    $region8: #{tpu_custom_call.1} parent=1 // pred_region
      %s15 = ssub.s32 256, 256
      %16 = vsyncadd [#allocation4], %s15
      %s17 = sshll.u32 [#allocation3], 4
      %s18 = int_to_ptr.vmem [resolvable:$true] %s17
      %23 = dma.hbm_to_vmem [thread:$0]  %s1, 256, %s18, [#allocation4], 128, 128, 8
    $region9: #{tpu_custom_call.1} parent=1 // pred_fallthru
      _
    // Predicated region
    $region10: #{tpu_custom_call.1} parent=1 // pred_check
      _
    $region11: #{tpu_custom_call.1} parent=1 // pred_check_branch
      %25 = sbr.rel (0) target = $region13
    $region12: #{tpu_custom_call.1} parent=1 // pred_region
      %26 = dma.done [#allocation4], 256
    $region13: #{tpu_custom_call.1} parent=1 // pred_fallthru
      _
    %s27 = sld [smem:[#allocation2]]
    %s28 = smax.f32 %s27, -1.0
    %s29 = smax.f32 %s27, 0.0
    %v30 = vld [vmem:[#allocation3] sm:$0xff]
    %v31 = vld [vmem:[#allocation3 + $0x8] sm:$0xff]
    %vm32 = vcmp.lt.f32.partialorder %v30, -0.2
    %vm33 = vcmp.lt.f32.partialorder %v31, -0.2
    %v34 = vstv %s28
    %v35 = vstv %s29
    %v36 = vsel %vm32, %v34, %v35
    %v37 = vsel %vm33, %v34, %v35
    %38 = vst [vmem:[#allocation6] sm:$0xff] %v36
    %39 = vst [vmem:[#allocation6 + $0x8] sm:$0xff] %v37
    // Predicated region
    $region14: #{tpu_custom_call.1} parent=1 // pred_check
      _
    $region15: #{tpu_custom_call.1} parent=1 // pred_check_branch
      %41 = sbr.rel (0) target = $region17
    $region16: #{tpu_custom_call.1} parent=1 // pred_region
      %s43 = ssub.s32 256, 256
      %44 = vsyncadd [#allocation5], %s43
      %s45 = sshll.u32 [#allocation6], 4
      %s46 = int_to_ptr.vmem [resolvable:$true] %s45
      %51 = dma.vmem_to_hbm [thread:$0]  %s46, 256, %s2, [#allocation5], 128, 128, 8
    $region17: #{tpu_custom_call.1} parent=1 // pred_fallthru
      _
    // Predicated region
    $region18: #{tpu_custom_call.1} parent=1 // pred_check
      _
    $region19: #{tpu_custom_call.1} parent=1 // pred_check_branch
      %53 = sbr.rel (0) target = $region21
    $region20: #{tpu_custom_call.1} parent=1 // pred_region
      %54 = dma.done [#allocation5], 256
    $region21: #{tpu_custom_call.1} parent=1 // pred_fallthru
      _
    %55 = vsyncpa [#allocation4], 1
    %56 = vsyncpa [#allocation5], 1

</llo_original>
